<compile_context>
chip_gen: v7x
topology: tpu7x:2x2x1
jax: 0.10.0
libtpu: 0.0.40
codegen_flags: <defaults>
</compile_context>

<pallas_src>
import functools

import jax
import jax.numpy as jnp
from jax.experimental import pallas as pl
from jax.experimental.pallas import tpu as pltpu

EPS = 1e-6       # LayerNorm eps (added to std, as in the PyTorch module)
NEG_INF = -1e9   # mask fill value (matches masked_fill_(-1e9))


# ---------------------------------------------------------------------------
# Hardware budget helpers
# ---------------------------------------------------------------------------
def _vmem_capacity_bytes():
    try:
        cap = getattr(pltpu.get_tpu_info(), "vmem_capacity_bytes", None)
        if cap:
            return int(cap)
    except Exception:
        pass
    return 64 * 1024 * 1024   # conservative (v7x-sized) fallback


_VMEM_CAP = _vmem_capacity_bytes()
_VMEM_LIMIT = int(_VMEM_CAP * 3 // 4)            # ~96 MiB on v5e/v6e, ~48 MiB on v7x
_BIG_VMEM = _VMEM_CAP >= 96 * 1024 * 1024        # True on 128 MiB-VMEM chips


def _compiler_params(dim_sem):
    return pltpu.CompilerParams(dimension_semantics=dim_sem,
                                vmem_limit_bytes=_VMEM_LIMIT)


def _pick_tile(dim, target, align, min_blocks=1):
    """Largest tile <= target that divides dim, is a multiple of align and
    yields >= min_blocks blocks; falls back to the full dim."""
    target = min(target, dim)
    if min_blocks > 1:
        target = min(target, max(align, dim // min_blocks))
    t = (target // align) * align
    while t >= align:
        if dim % t == 0:
            return t
        t -= align
    return dim


def _layernorm(x, gamma, beta):
    # Matches the PyTorch LayerNorm: unbiased std (ddof=1), eps added to std.
    d = x.shape[-1]
    mean = jnp.mean(x, axis=-1, keepdims=True)
    var = jnp.sum((x - mean) ** 2, axis=-1, keepdims=True) / jnp.float32(d - 1)
    return gamma * (x - mean) / (jnp.sqrt(var) + EPS) + beta


# ---------------------------------------------------------------------------
# Kernel 1: LayerNorm (optional) + N projections, written once to HBM (bf16)
# ---------------------------------------------------------------------------
def _ln_project_kernel(*refs, apply_ln, n_out):
    x_ref = refs[0]
    w_refs = refs[1:1 + n_out]
    g_ref = refs[1 + n_out]
    b_ref = refs[2 + n_out]
    out_refs = refs[3 + n_out:]

    x = x_ref[0].astype(jnp.float32)                       # (ts, D)
    if apply_ln:
        x = _layernorm(x, g_ref[...].astype(jnp.float32),
                       b_ref[...].astype(jnp.float32))
    xm = x.astype(w_refs[0].dtype)                         # MXU operand dtype
    for i in range(n_out):
        out_refs[i][0] = jnp.dot(xm, w_refs[i][...],
                                 preferred_element_type=jnp.float32
                                 ).astype(out_refs[i].dtype)


def ln_project(x, weights, gamma, beta, *, apply_ln, out_dtype):
    """Hoists the (LayerNorm +) Q/K/V projections out of the flash loop: each
    projection is computed exactly once and streamed back later as bf16 tiles."""
    B, S, D = x.shape
    n = len(weights)
    ts = _pick_tile(S, 256, 16, min_blocks=2 if B == 1 else 1)
    const = lambda b, si: (0, 0)
    row = lambda b, si: (b, si, 0)

    in_specs = [pl.BlockSpec((1, ts, D), row)]
    in_specs += [pl.BlockSpec(w.shape, const) for w in weights]
    in_specs += [pl.BlockSpec((1, D), const), pl.BlockSpec((1, D), const)]
    out_specs = tuple(pl.BlockSpec((1, ts, w.shape[1]), row) for w in weights)
    out_shape = tuple(jax.ShapeDtypeStruct((B, S, w.shape[1]), out_dtype)
                      for w in weights)

    return pl.pallas_call(
        functools.partial(_ln_project_kernel, apply_ln=apply_ln, n_out=n),
        out_shape=out_shape,
        grid=(B, S // ts),
        in_specs=in_specs,
        out_specs=out_specs,
        compiler_params=_compiler_params(("parallel", "parallel")),
    )(x, *weights, gamma, beta)


# ---------------------------------------------------------------------------
# Kernel 2: flash attention (online softmax) + output projection + residual add
# ---------------------------------------------------------------------------
def _flash_attn_kernel(*refs, h, causal, has_mask, approx_recip):
    if has_mask:
        (x_ref, q_ref, k_ref, v_ref, mask_ref, wo_ref,
         out_ref, acc_sc, m_sc, l_sc) = refs
    else:
        (x_ref, q_ref, k_ref, v_ref, wo_ref,
         out_ref, acc_sc, m_sc, l_sc) = refs
        mask_ref = None

    qi = pl.program_id(1)
    ki = pl.program_id(2)
    nk = pl.num_programs(2)

    tq, d_model = acc_sc.shape
    tk = k_ref.shape[1]
    dk = d_model // h
    mdt = q_ref.dtype                          # MXU operand dtype (bf16 or f32)

    # ---- init at the first KV tile of every (batch, q-tile) sweep ----------
    @pl.when(ki == 0)
    def _init():
        acc_sc[...] = jnp.zeros(acc_sc.shape, jnp.float32)
        m_sc[...] = jnp.full(m_sc.shape, -jnp.inf, jnp.float32)
        l_sc[...] = jnp.zeros(l_sc.shape, jnp.float32)

    # ---- online-softmax update for the current KV tile ---------------------
    def _update(allowed):
        q = q_ref[0]          # (tq, D), already scaled by 1/sqrt(dk)
        k = k_ref[0]          # (tk, D)
        v = v_ref[0]          # (tk, D)
        # TODO(synk): for dk < 128 the per-head column slices below are
        #             partial-lane accesses; restructure into 128-lane head
        #             groups when targeting v6e/v7x with small d_k.
        for hd in range(h):   # static head loop over lane-aligned column slices
            lo = hd * dk
            s = jax.lax.dot_general(                       # q_h @ k_h.T  (tq, tk)
                q[:, lo:lo + dk], k[:, lo:lo + dk],
                dimension_numbers=(((1,), (1,)), ((), ())),
                preferred_element_type=jnp.float32)
            if allowed is not None:
                s = jnp.where(allowed, s, jnp.float32(NEG_INF))
            m_prev = m_sc[:, hd:hd + 1]                    # (tq, 1)
            l_prev = l_sc[:, hd:hd + 1]
            m_new = jnp.maximum(m_prev, jnp.max(s, axis=-1, keepdims=True))
            alpha = jnp.exp(m_prev - m_new)
            p = jnp.exp(s - m_new)                         # (tq, tk)
            l_sc[:, hd:hd + 1] = alpha * l_prev + jnp.sum(p, axis=-1, keepdims=True)
            m_sc[:, hd:hd + 1] = m_new
            acc_sc[:, lo:lo + dk] = alpha * acc_sc[:, lo:lo + dk] + jnp.dot(
                p.astype(mdt), v[:, lo:lo + dk], preferred_element_type=jnp.float32)

    if causal:
        live = ki * tk < (qi + 1) * tq                 # tile has any visible key
        full = (ki + 1) * tk <= qi * tq + 1            # tile fully below diagonal

        @pl.when(live & full)                          # fast path: no mask at all
        def _full_tile():
            _update(None)

        @pl.when(live & jnp.logical_not(full))         # diagonal tile: iota mask
        def _diag_tile():
            q_pos = qi * tq + jax.lax.broadcasted_iota(jnp.int32, (tq, tk), 0)
            k_pos = ki * tk + jax.lax.broadcasted_iota(jnp.int32, (tq, tk), 1)
            _update(q_pos >= k_pos)
    elif has_mask:
        _update(mask_ref[0, 0] != 0)                   # (tq, tk) int8 tile
    else:
        _update(None)

    # ---- finalize: lane-dense normalize, output projection, residual add ---
    @pl.when(ki == nk - 1)
    def _finalize():
        inv_l = pl.reciprocal(l_sc[...], approx=approx_recip)        # (tq, h), EUP
        parts = [acc_sc[:, hd * dk:(hd + 1) * dk] * inv_l[:, hd:hd + 1]
                 for hd in range(h)]
        ctx = jnp.concatenate(parts, axis=1).astype(mdt)             # (tq, D)
        attn = jnp.dot(ctx, wo_ref[...], preferred_element_type=jnp.float32)
        out_ref[0] = (x_ref[0].astype(jnp.float32) + attn).astype(out_ref.dtype)


def flash_attn_addnorm(x, q, k, v, mask, wo, *, h, causal):
    """out = x + MHA(q_proj=q, k_proj=k, v_proj=v) @ Wo  (q pre-scaled)."""
    B, Sq, D = x.shape
    Sk = k.shape[1]
    has_mask = (mask is not None) and (not causal)
    tq = _pick_tile(Sq, 256, 32 if has_mask else 16,
                    min_blocks=2 if B == 1 else 1)
    tk = _pick_tile(Sk, 512, 128)
    nq, nk = Sq // tq, Sk // tk
    approx_recip = (q.dtype != jnp.float32)    # exact reciprocal on the fp32 path

    if causal:
        # Clamp the kv block index so fully-future tiles are never DMA'd: the
        # pipeline elides the copy when the block index does not change.
        def kv_idx(b, qi, ki):
            kmax = ((qi + 1) * tq - 1) // tk
            return (b, jnp.minimum(ki, kmax), 0)
    else:
        kv_idx = lambda b, qi, ki: (b, ki, 0)

    row_q = lambda b, qi, ki: (b, qi, 0)
    const = lambda b, qi, ki: (0, 0)

    in_specs = [
        pl.BlockSpec((1, tq, D), row_q),   # x (residual)
        pl.BlockSpec((1, tq, D), row_q),   # q (MXU dtype, pre-scaled)
        pl.BlockSpec((1, tk, D), kv_idx),  # k (MXU dtype)
        pl.BlockSpec((1, tk, D), kv_idx),  # v (MXU dtype)
    ]
    inputs = [x, q, k, v]
    if has_mask:
        # TODO(synk): for pure padding masks scalar-prefetch per-batch key
        #             lengths instead of DMA'ing the (B,1,Sq,Sk) int8 mask.
        mask = jnp.broadcast_to(mask, (B, 1, Sq, Sk)).astype(jnp.int8)
        in_specs.append(pl.BlockSpec((1, 1, tq, tk), lambda b, qi, ki: (b, 0, qi, ki)))
        inputs.append(mask)
    in_specs.append(pl.BlockSpec((D, D), const))   # Wo
    inputs.append(wo)

    kernel = functools.partial(_flash_attn_kernel, h=h, causal=causal,
                               has_mask=has_mask, approx_recip=approx_recip)
    return pl.pallas_call(
        kernel,
        out_shape=jax.ShapeDtypeStruct((B, Sq, D), x.dtype),
        grid=(B, nq, nk),
        in_specs=in_specs,
        out_specs=pl.BlockSpec((1, tq, D), row_q),
        scratch_shapes=[
            pltpu.VMEM((tq, D), jnp.float32),   # acc (per-head column slices)
            pltpu.VMEM((tq, h), jnp.float32),   # running max m, per head
            pltpu.VMEM((tq, h), jnp.float32),   # running sum l, per head
        ],
        compiler_params=_compiler_params(("parallel", "parallel", "arbitrary")),
    )(*inputs)


# ---------------------------------------------------------------------------
# Kernel 3: AddNorm + FeedForward (sequence + D_FF tiled, output accumulator)
# ---------------------------------------------------------------------------
def _ffn_addnorm_kernel(x_ref, w1_ref, b1_ref, w2_ref, b2_ref, g_ref, beta_ref,
                        out_ref, xn_sc, acc_sc):
    fi = pl.program_id(2)
    nf = pl.num_programs(2)
    mdt = w1_ref.dtype

    @pl.when(fi == 0)
    def _init():
        x = x_ref[0].astype(jnp.float32)
        xn = _layernorm(x, g_ref[...].astype(jnp.float32),
                        beta_ref[...].astype(jnp.float32))
        xn_sc[...] = xn.astype(xn_sc.dtype)          # cached in MXU dtype
        acc_sc[...] = jnp.zeros(acc_sc.shape, jnp.float32)

    hid = jnp.dot(xn_sc[...], w1_ref[...], preferred_element_type=jnp.float32)
    hid = jnp.maximum(hid + b1_ref[...].astype(jnp.float32), 0.0)   # bias + ReLU
    acc_sc[...] += jnp.dot(hid.astype(mdt), w2_ref[...],
                           preferred_element_type=jnp.float32)      # (ts, D)

    @pl.when(fi == nf - 1)
    def _finalize():
        x = x_ref[0].astype(jnp.float32)
        out_ref[0] = (x + acc_sc[...]
                      + b2_ref[...].astype(jnp.float32)).astype(out_ref.dtype)


def ffn_addnorm(x, w1, b1, w2, b2, gamma, beta):
    B, S, D = x.shape
    D_FF = w1.shape[1]
    ts = _pick_tile(S, 512 if _BIG_VMEM else 256, 16,
                    min_blocks=2 if B == 1 else 1)
    tf = _pick_tile(D_FF, 2048 if _BIG_VMEM else 1024, 128)
    ns, nf = S // ts, D_FF // tf
    const = lambda b, si, fi: (0, 0)

    return pl.pallas_call(
        _ffn_addnorm_kernel,
        out_shape=jax.ShapeDtypeStruct((B, S, D), x.dtype),
        grid=(B, ns, nf),
        in_specs=[
            pl.BlockSpec((1, ts, D), lambda b, si, fi: (b, si, 0)),  # x
            pl.BlockSpec((D, tf), lambda b, si, fi: (0, fi)),        # W1 column tile
            pl.BlockSpec((1, tf), lambda b, si, fi: (0, fi)),        # b1 tile
            pl.BlockSpec((tf, D), lambda b, si, fi: (fi, 0)),        # W2 row tile
            pl.BlockSpec((1, D), const),                             # b2
            pl.BlockSpec((1, D), const),                             # gamma
            pl.BlockSpec((1, D), const),                             # beta
        ],
        out_specs=pl.BlockSpec((1, ts, D), lambda b, si, fi: (b, si, 0)),
        scratch_shapes=[
            pltpu.VMEM((ts, D), w1.dtype),      # normalized x in MXU dtype
            pltpu.VMEM((ts, D), jnp.float32),   # output accumulator over D_FF
        ],
        compiler_params=_compiler_params(("parallel", "parallel", "arbitrary")),
    )(x, w1, b1, w2, b2, gamma, beta)


# ---------------------------------------------------------------------------
# DecoderBlock forward
# ---------------------------------------------------------------------------
def decoder_block(tgt, encoder_output, src_mask, tgt_mask, p, *, h,
                  mxu_dtype=jnp.bfloat16, causal_tgt=True):
    """If causal_tgt=True the standard lower-triangular tgt_mask is regenerated
    in-kernel (no O(S^2) mask DMA); pass causal_tgt=False to use an arbitrary
    tgt_mask via the DMA'd-mask path."""
    D = tgt.shape[-1]
    dk = D // h
    scale = jnp.float32(1.0 / (dk ** 0.5))
    mx = lambda w: w.astype(mxu_dtype)

    # addnorm1: tgt = tgt + self_attn(LN(tgt), LN(tgt), LN(tgt), tgt_mask)
    q, k, v = ln_project(tgt,
                         [mx(p['sa_wq'] * scale), mx(p['sa_wk']), mx(p['sa_wv'])],
                         p['ln1_g'], p['ln1_b'], apply_ln=True, out_dtype=mxu_dtype)
    tgt = flash_attn_addnorm(tgt, q, k, v, None if causal_tgt else tgt_mask,
                             mx(p['sa_wo']), h=h, causal=causal_tgt)

    # addnorm2: tgt = tgt + cross_attn(LN(tgt), enc, enc, src_mask)
    (q,) = ln_project(tgt, [mx(p['ca_wq'] * scale)],
                      p['ln2_g'], p['ln2_b'], apply_ln=True, out_dtype=mxu_dtype)
    k, v = ln_project(encoder_output, [mx(p['ca_wk']), mx(p['ca_wv'])],
                      p['ln2_g'], p['ln2_b'], apply_ln=False, out_dtype=mxu_dtype)
    tgt = flash_attn_addnorm(tgt, q, k, v, src_mask, mx(p['ca_wo']),
                             h=h, causal=False)

    # addnorm3: tgt = tgt + ffn(LN(tgt))
    tgt = ffn_addnorm(tgt, mx(p['ff_w1']), p['ff_b1'], mx(p['ff_w2']), p['ff_b2'],
                      p['ln3_g'], p['ln3_b'])
    return tgt


# ---------------------------------------------------------------------------
# Pure-JAX reference (mirrors the PyTorch module exactly) for validation
# ---------------------------------------------------------------------------
def _ref_layernorm(x, g, b):
    d = x.shape[-1]
    mean = jnp.mean(x, axis=-1, keepdims=True)
    var = jnp.sum((x - mean) ** 2, axis=-1, keepdims=True) / (d - 1)
    return g * (x - mean) / (jnp.sqrt(var) + EPS) + b


def _ref_mha(q_in, kv_in, mask, wq, wk, wv, wo, h):
    B, Sq, D = q_in.shape
    Sk = kv_in.shape[1]
    dk = D // h
    q = (q_in @ wq).reshape(B, Sq, h, dk).transpose(0, 2, 1, 3)
    k = (kv_in @ wk).reshape(B, Sk, h, dk).transpose(0, 2, 1, 3)
    v = (kv_in @ wv).reshape(B, Sk, h, dk).transpose(0, 2, 1, 3)
    scores = q @ k.transpose(0, 1, 3, 2) / jnp.sqrt(jnp.float32(dk))
    scores = jnp.where(mask == 0, NEG_INF, scores)
    probs = jax.nn.softmax(scores, axis=-1)
    ctx = (probs @ v).transpose(0, 2, 1, 3).reshape(B, Sq, D)
    return ctx @ wo


def decoder_block_ref(tgt, enc, src_mask, tgt_mask, p, *, h):
    xn = _ref_layernorm(tgt, p['ln1_g'], p['ln1_b'])
    tgt = tgt + _ref_mha(xn, xn, tgt_mask,
                         p['sa_wq'], p['sa_wk'], p['sa_wv'], p['sa_wo'], h)
    xn = _ref_layernorm(tgt, p['ln2_g'], p['ln2_b'])
    tgt = tgt + _ref_mha(xn, enc, src_mask,
                         p['ca_wq'], p['ca_wk'], p['ca_wv'], p['ca_wo'], h)
    xn = _ref_layernorm(tgt, p['ln3_g'], p['ln3_b'])
    hdn = jnp.maximum(xn @ p['ff_w1'] + p['ff_b1'], 0.0)
    tgt = tgt + (hdn @ p['ff_w2'] + p['ff_b2'])
    return tgt


# ---------------------------------------------------------------------------
if __name__ == "__main__":
    B, S_TGT, S_SRC, D, H, D_FF = 2, 8, 8, 32, 4, 64

    key = jax.random.PRNGKey(0)
    ks = jax.random.split(key, 16)

    def w(k, shape, scale=0.1):
        return (scale * jax.random.normal(k, shape)).astype(jnp.float32)

    params = {
        # self-attention projections (stored (D_in, D_out), bias=False as in the module)
        'sa_wq': w(ks[0], (D, D)), 'sa_wk': w(ks[1], (D, D)),
        'sa_wv': w(ks[2], (D, D)), 'sa_wo': w(ks[3], (D, D)),
        # cross-attention projections
        'ca_wq': w(ks[4], (D, D)), 'ca_wk': w(ks[5], (D, D)),
        'ca_wv': w(ks[6], (D, D)), 'ca_wo': w(ks[7], (D, D)),
        # feed-forward (nn.Linear biases kept)
        'ff_w1': w(ks[8], (D, D_FF)), 'ff_b1': w(ks[9], (1, D_FF)),
        'ff_w2': w(ks[10], (D_FF, D)), 'ff_b2': w(ks[11], (1, D)),
        # layer norms (gamma=1, beta=0 as in __init__)
        'ln1_g': jnp.ones((1, D), jnp.float32), 'ln1_b': jnp.zeros((1, D), jnp.float32),
        'ln2_g': jnp.ones((1, D), jnp.float32), 'ln2_b': jnp.zeros((1, D), jnp.float32),
        'ln3_g': jnp.ones((1, D), jnp.float32), 'ln3_b': jnp.zeros((1, D), jnp.float32),
    }

    tgt = jax.random.normal(ks[12], (B, S_TGT, D), dtype=jnp.float32)
    enc = jax.random.normal(ks[13], (B, S_SRC, D), dtype=jnp.float32)

    # causal target mask, all-ones source mask, shape (B, 1, Sq, Sk)
    causal = jnp.tril(jnp.ones((S_TGT, S_TGT), jnp.int32))
    tgt_mask = jnp.broadcast_to(causal[None, None], (B, 1, S_TGT, S_TGT))
    src_mask = jnp.ones((B, 1, S_TGT, S_SRC), jnp.int32)

    ref = decoder_block_ref(tgt, enc, src_mask, tgt_mask, params, h=H)

    # fp32 MXU path (tight check), causal mask regenerated in-kernel
    out_f32 = decoder_block(tgt, enc, src_mask, tgt_mask, params, h=H,
                            mxu_dtype=jnp.float32)
    out_f32 = jax.block_until_ready(out_f32)
    assert out_f32.shape == (B, S_TGT, D)
    assert jnp.allclose(out_f32, ref, atol=5e-3, rtol=5e-3), "fp32 mismatch vs reference"

    # fp32 MXU path through the DMA'd tgt_mask branch (exercises has_mask path)
    out_msk = decoder_block(tgt, enc, src_mask, tgt_mask, params, h=H,
                            mxu_dtype=jnp.float32, causal_tgt=False)
    out_msk = jax.block_until_ready(out_msk)
    assert jnp.allclose(out_msk, ref, atol=5e-3, rtol=5e-3), "masked-path mismatch vs reference"

    # bf16 MXU operands (default / performance path), fp32 statistics & residual
    out_bf16 = decoder_block(tgt, enc, src_mask, tgt_mask, params, h=H,
                             mxu_dtype=jnp.bfloat16)
    out_bf16 = jax.block_until_ready(out_bf16)
    assert out_bf16.shape == (B, S_TGT, D)
    assert jnp.allclose(out_bf16, ref, atol=5e-2, rtol=5e-2), "bf16 mismatch vs reference"

    print("KERNEL_OK")
</pallas_src>

<mosaic_0001>
module attributes {stable_mosaic.version = 11 : i64} {
  func.func @_ln_project_kernel(%arg0: i32, %arg1: i32, %arg2: memref<1x8x32xf32, #tpu.memory_space<vmem>>, %arg3: memref<32x32xf32, #tpu.memory_space<vmem>>, %arg4: memref<32x32xf32, #tpu.memory_space<vmem>>, %arg5: memref<32x32xf32, #tpu.memory_space<vmem>>, %arg6: memref<1x32xf32, #tpu.memory_space<vmem>>, %arg7: memref<1x32xf32, #tpu.memory_space<vmem>>, %arg8: memref<1x8x32xf32, #tpu.memory_space<vmem>>, %arg9: memref<1x8x32xf32, #tpu.memory_space<vmem>>, %arg10: memref<1x8x32xf32, #tpu.memory_space<vmem>>) attributes {dimension_semantics = [#tpu.dimension_semantics<parallel>, #tpu.dimension_semantics<parallel>], iteration_bounds = array<i64: 2, 1>, scalar_prefetch = 0 : i64, scratch_operands = 0 : i64, tpu.core_type = #tpu.core_type<tc>, window_params = [{transform_indices = @transform_0, window_bounds = array<i64: 1, 8, 32>}, {pipeline_mode = #tpu.pipeline_mode<synchronous>, transform_indices = @transform_1, window_bounds = array<i64: 32, 32>}, {pipeline_mode = #tpu.pipeline_mode<synchronous>, transform_indices = @transform_2, window_bounds = array<i64: 32, 32>}, {pipeline_mode = #tpu.pipeline_mode<synchronous>, transform_indices = @transform_3, window_bounds = array<i64: 32, 32>}, {pipeline_mode = #tpu.pipeline_mode<synchronous>, transform_indices = @transform_4, window_bounds = array<i64: 1, 32>}, {pipeline_mode = #tpu.pipeline_mode<synchronous>, transform_indices = @transform_5, window_bounds = array<i64: 1, 32>}, {transform_indices = @transform_6, window_bounds = array<i64: 1, 8, 32>}, {transform_indices = @transform_7, window_bounds = array<i64: 1, 8, 32>}, {transform_indices = @transform_8, window_bounds = array<i64: 1, 8, 32>}]} {
    %c0 = arith.constant 0 : index
    %c0_0 = arith.constant 0 : index
    %c0_1 = arith.constant 0 : index
    %0 = vector.load %arg2[%c0, %c0_0, %c0_1] : memref<1x8x32xf32, #tpu.memory_space<vmem>>, vector<1x8x32xf32>
    %1 = vector.shape_cast %0 : vector<1x8x32xf32> to vector<8x32xf32>
    %c0_2 = arith.constant 0 : index
    %c0_3 = arith.constant 0 : index
    %2 = vector.load %arg6[%c0_2, %c0_3] : memref<1x32xf32, #tpu.memory_space<vmem>>, vector<1x32xf32>
    %c0_4 = arith.constant 0 : index
    %c0_5 = arith.constant 0 : index
    %3 = vector.load %arg7[%c0_4, %c0_5] : memref<1x32xf32, #tpu.memory_space<vmem>>, vector<1x32xf32>
    %cst = arith.constant dense<0.000000e+00> : vector<8xf32>
    %4 = vector.multi_reduction <add>, %1, %cst [1] : vector<8x32xf32> to vector<8xf32>
    %5 = vector.shape_cast %4 : vector<8xf32> to vector<8x1xf32>
    %cst_6 = arith.constant 3.200000e+01 : f32
    %6 = vector.broadcast %cst_6 : f32 to vector<8x1xf32>
    %7 = arith.divf %5, %6 : vector<8x1xf32>
    %8 = vector.broadcast %7 : vector<8x1xf32> to vector<8x32xf32>
    %9 = arith.subf %1, %8 : vector<8x32xf32>
    %10 = arith.mulf %9, %9 : vector<8x32xf32>
    %cst_7 = arith.constant dense<0.000000e+00> : vector<8xf32>
    %11 = vector.multi_reduction <add>, %10, %cst_7 [1] : vector<8x32xf32> to vector<8xf32>
    %12 = vector.shape_cast %11 : vector<8xf32> to vector<8x1xf32>
    %cst_8 = arith.constant 3.100000e+01 : f32
    %13 = vector.broadcast %cst_8 : f32 to vector<8x1xf32>
    %14 = arith.divf %12, %13 : vector<8x1xf32>
    %15 = vector.broadcast %7 : vector<8x1xf32> to vector<8x32xf32>
    %16 = arith.subf %1, %15 : vector<8x32xf32>
    %17 = vector.broadcast %2 : vector<1x32xf32> to vector<8x32xf32>
    %18 = arith.mulf %17, %16 : vector<8x32xf32>
    %19 = math.sqrt %14 : vector<8x1xf32>
    %cst_9 = arith.constant 9.99999997E-7 : f32
    %20 = vector.broadcast %cst_9 : f32 to vector<8x1xf32>
    %21 = arith.addf %19, %20 : vector<8x1xf32>
    %22 = vector.broadcast %21 : vector<8x1xf32> to vector<8x32xf32>
    %23 = arith.divf %18, %22 : vector<8x32xf32>
    %24 = vector.broadcast %3 : vector<1x32xf32> to vector<8x32xf32>
    %25 = arith.addf %23, %24 : vector<8x32xf32>
    %c0_10 = arith.constant 0 : index
    %c0_11 = arith.constant 0 : index
    %26 = vector.load %arg3[%c0_10, %c0_11] : memref<32x32xf32, #tpu.memory_space<vmem>>, vector<32x32xf32>
    %cst_12 = arith.constant dense<0.000000e+00> : vector<8x32xf32>
    %27 = tpu.matmul %25, %26, %cst_12 {dimension_numbers = #tpu.dot_dimension_numbers<[1], [0], [0], [1], [0, 0, 1, 1], [], []>} : vector<8x32xf32>, vector<32x32xf32>, vector<8x32xf32> -> vector<8x32xf32>
    %c0_13 = arith.constant 0 : index
    %c0_14 = arith.constant 0 : index
    %c0_15 = arith.constant 0 : index
    %28 = vector.load %arg8[%c0_13, %c0_14, %c0_15] : memref<1x8x32xf32, #tpu.memory_space<vmem>>, vector<1x8x32xf32>
    %29 = vector.shape_cast %28 : vector<1x8x32xf32> to vector<8x32xf32>
    %30 = vector.shape_cast %27 : vector<8x32xf32> to vector<1x8x32xf32>
    tpu.vector_store %arg8[%c0_13, %c0_14, %c0_15], %30 {strides = array<i32>} : memref<1x8x32xf32, #tpu.memory_space<vmem>>, vector<1x8x32xf32>,
    %c0_16 = arith.constant 0 : index
    %c0_17 = arith.constant 0 : index
    %31 = vector.load %arg4[%c0_16, %c0_17] : memref<32x32xf32, #tpu.memory_space<vmem>>, vector<32x32xf32>
    %cst_18 = arith.constant dense<0.000000e+00> : vector<8x32xf32>
    %32 = tpu.matmul %25, %31, %cst_18 {dimension_numbers = #tpu.dot_dimension_numbers<[1], [0], [0], [1], [0, 0, 1, 1], [], []>} : vector<8x32xf32>, vector<32x32xf32>, vector<8x32xf32> -> vector<8x32xf32>
    %c0_19 = arith.constant 0 : index
    %c0_20 = arith.constant 0 : index
    %c0_21 = arith.constant 0 : index
    %33 = vector.load %arg9[%c0_19, %c0_20, %c0_21] : memref<1x8x32xf32, #tpu.memory_space<vmem>>, vector<1x8x32xf32>
    %34 = vector.shape_cast %33 : vector<1x8x32xf32> to vector<8x32xf32>
    %35 = vector.shape_cast %32 : vector<8x32xf32> to vector<1x8x32xf32>
    tpu.vector_store %arg9[%c0_19, %c0_20, %c0_21], %35 {strides = array<i32>} : memref<1x8x32xf32, #tpu.memory_space<vmem>>, vector<1x8x32xf32>,
    %c0_22 = arith.constant 0 : index
    %c0_23 = arith.constant 0 : index
    %36 = vector.load %arg5[%c0_22, %c0_23] : memref<32x32xf32, #tpu.memory_space<vmem>>, vector<32x32xf32>
    %cst_24 = arith.constant dense<0.000000e+00> : vector<8x32xf32>
    %37 = tpu.matmul %25, %36, %cst_24 {dimension_numbers = #tpu.dot_dimension_numbers<[1], [0], [0], [1], [0, 0, 1, 1], [], []>} : vector<8x32xf32>, vector<32x32xf32>, vector<8x32xf32> -> vector<8x32xf32>
    %c0_25 = arith.constant 0 : index
    %c0_26 = arith.constant 0 : index
    %c0_27 = arith.constant 0 : index
    %38 = vector.load %arg10[%c0_25, %c0_26, %c0_27] : memref<1x8x32xf32, #tpu.memory_space<vmem>>, vector<1x8x32xf32>
    %39 = vector.shape_cast %38 : vector<1x8x32xf32> to vector<8x32xf32>
    %40 = vector.shape_cast %37 : vector<8x32xf32> to vector<1x8x32xf32>
    tpu.vector_store %arg10[%c0_25, %c0_26, %c0_27], %40 {strides = array<i32>} : memref<1x8x32xf32, #tpu.memory_space<vmem>>, vector<1x8x32xf32>,
    return
  }
  func.func @transform_0(%arg0: i32, %arg1: i32) -> (i32, i32, i32) {
    %c0_i32 = arith.constant 0 : i32
    %c0_i32_0 = arith.constant 0 : i32
    return %arg0, %arg1, %c0_i32 : i32, i32, i32
  }
  func.func @transform_1(%arg0: i32, %arg1: i32) -> (i32, i32) {
    %c0_i32 = arith.constant 0 : i32
    %c0_i32_0 = arith.constant 0 : i32
    %c0_i32_1 = arith.constant 0 : i32
    return %c0_i32, %c0_i32_0 : i32, i32
  }
  func.func @transform_2(%arg0: i32, %arg1: i32) -> (i32, i32) {
    %c0_i32 = arith.constant 0 : i32
    %c0_i32_0 = arith.constant 0 : i32
    %c0_i32_1 = arith.constant 0 : i32
    return %c0_i32, %c0_i32_0 : i32, i32
  }
  func.func @transform_3(%arg0: i32, %arg1: i32) -> (i32, i32) {
    %c0_i32 = arith.constant 0 : i32
    %c0_i32_0 = arith.constant 0 : i32
    %c0_i32_1 = arith.constant 0 : i32
    return %c0_i32, %c0_i32_0 : i32, i32
  }
  func.func @transform_4(%arg0: i32, %arg1: i32) -> (i32, i32) {
    %c0_i32 = arith.constant 0 : i32
    %c0_i32_0 = arith.constant 0 : i32
    %c0_i32_1 = arith.constant 0 : i32
    return %c0_i32, %c0_i32_0 : i32, i32
  }
  func.func @transform_5(%arg0: i32, %arg1: i32) -> (i32, i32) {
    %c0_i32 = arith.constant 0 : i32
    %c0_i32_0 = arith.constant 0 : i32
    %c0_i32_1 = arith.constant 0 : i32
    return %c0_i32, %c0_i32_0 : i32, i32
  }
  func.func @transform_6(%arg0: i32, %arg1: i32) -> (i32, i32, i32) {
    %c0_i32 = arith.constant 0 : i32
    %c0_i32_0 = arith.constant 0 : i32
    return %arg0, %arg1, %c0_i32 : i32, i32, i32
  }
  func.func @transform_7(%arg0: i32, %arg1: i32) -> (i32, i32, i32) {
    %c0_i32 = arith.constant 0 : i32
    %c0_i32_0 = arith.constant 0 : i32
    return %arg0, %arg1, %c0_i32 : i32, i32, i32
  }
  func.func @transform_8(%arg0: i32, %arg1: i32) -> (i32, i32, i32) {
    %c0_i32 = arith.constant 0 : i32
    %c0_i32_0 = arith.constant 0 : i32
    return %arg0, %arg1, %c0_i32 : i32, i32, i32
  }
}

</mosaic_0001>

<llo_original>
// kernel: tpu_custom_call.1
$region0: #{tpu_custom_call.1}
  #allocation0 [shape = 'u32[]', space=smem, size = 0x4, offset = 0x4, fixed_abs, tag = 'smem constant byte address 0x4 - core index']
  #allocation1 [shape = 'u32[144,128]{1,0:T(1,128)}', space=vmem, size = 0x12000, scoped, tag = 'internal scratch']
  %s0 = inlined_call_operand.hbm [shape: f32[2,8,32], index: 0, kind: input, shape index: {}]
  %s1 = inlined_call_operand.hbm [shape: f32[32,32], index: 1, kind: input, shape index: {}]
  %s2 = inlined_call_operand.hbm [shape: f32[32,32], index: 2, kind: input, shape index: {}]
  %s3 = inlined_call_operand.hbm [shape: f32[32,32], index: 3, kind: input, shape index: {}]
  %s4 = inlined_call_operand.vmem [shape: f32[1,32], index: 4, kind: input, shape index: {}]
  %s5 = inlined_call_operand.vmem [shape: f32[1,32], index: 5, kind: input, shape index: {}]
  %s6 = inlined_call_operand.hbm [shape: f32[2,8,32], index: 6, kind: output, shape index: {0}]
  %s7 = inlined_call_operand.hbm [shape: f32[2,8,32], index: 7, kind: output, shape index: {1}]
  %s8 = inlined_call_operand.hbm [shape: f32[2,8,32], index: 8, kind: output, shape index: {2}]
  %9 = xla_tuple %s6, %s7, %s8
  %s10 = sld [smem:[#allocation0]]
  $region89: #{tpu_custom_call.1} parent=0
    _
  %s12 = ssub.s32 1, %s10
  %s13 = scalar_select 0, %s12, %s10
  $region1: #{tpu_custom_call.1} parent=0
    #allocation2 [shape = 'u8[8192]{0}', space=vmem, size = 0x2000, scoped, tag = 'input window, operand 0']
    #allocation3 [shape = 's32[2]{0}', space=sflag, size = 0x8, scoped, tag = 'scoped memory for tpu_custom_call.1']
    #allocation4 [shape = 's32[2]{0}', space=sflag, size = 0x8, scoped, tag = 'scoped memory for tpu_custom_call.1']
    #allocation5 [shape = 'u8[16384]{0}', space=vmem, size = 0x4000, scoped, tag = 'input window, operand 1, single buffered']
    #allocation6 [shape = 's32[1]{0}', space=sflag, size = 0x4, scoped, tag = 'scoped memory for tpu_custom_call.1']
    #allocation7 [shape = 'u8[16384]{0}', space=vmem, size = 0x4000, scoped, tag = 'input window, operand 2, single buffered']
    #allocation8 [shape = 'u8[16384]{0}', space=vmem, size = 0x4000, scoped, tag = 'input window, operand 3, single buffered']
    #allocation9 [shape = 's32[1]{0}', space=sflag, size = 0x4, scoped, tag = 'scoped memory for tpu_custom_call.1']
    #allocation10 [shape = 'u8[8192]{0}', space=vmem, size = 0x2000, scoped, tag = 'output window, operand 0']
    #allocation11 [shape = 'u8[8192]{0}', space=vmem, size = 0x2000, scoped, tag = 'output window, operand 1']
    #allocation12 [shape = 's32[2]{0}', space=sflag, size = 0x8, scoped, tag = 'scoped memory for tpu_custom_call.1']
    #allocation13 [shape = 'u8[8192]{0}', space=vmem, size = 0x2000, scoped, tag = 'output window, operand 2']
    %14 = vsyncpa [#allocation3], 0
    %s15 = scalar_lea.sflag [#allocation3], 1
    %16 = vsyncpa %s15, 0
    %17 = vsyncpa [#allocation6], 0
    %18 = vsyncpa [#allocation9], 0
    %19 = vsyncpa [#allocation4], 0
    %s20 = scalar_lea.sflag [#allocation4], 1
    %21 = vsyncpa %s20, 0
    %22 = vsyncpa [#allocation12], 0
    %s23 = scalar_lea.sflag [#allocation12], 1
    %24 = vsyncpa %s23, 0
    loop: start=0, step=1, limit=4
    $region2: #{tpu_custom_call.1} parent=1 // loop_pre_header
      _
    $region3: #{tpu_custom_call.1} parent=1 // loop_header
      %s26 = sphi 0, %s30
      %p27 = scmp.ge.s32.totalorder %s26, 4
      %s33 = sphi 0, %s45
      %s34 = sphi 0, %s41
      %s35 = sphi 0, %s33
      %s36 = sphi 0, %s34
      %s37 = sphi 0, %s35
      %s38 = sphi 0, %s36
      %s50 = sphi 0, %s52
      %s53 = sphi 0, %s50
      %s54 = sphi 0, %s53
      %s70 = sphi 0, %s54
      %s74 = sphi 0, %s74
      %s76 = sphi 0, %s74
      %s77 = sphi 0, %s76
      %s91 = sphi 0, %s77
      %s95 = sphi 0, %s95
      %s97 = sphi 0, %s95
      %s98 = sphi 0, %s97
      %s112 = sphi 0, %s98
      %s116 = sphi 0, %s116
      %s118 = sphi 0, %s116
      %s119 = sphi 0, %s118
      %s133 = sphi 0, %s119
      %s137 = sphi 0, %s137
      %s139 = sphi 0, %s137
      %s140 = sphi 0, %s139
      %s154 = sphi 0, %s140
      %s158 = sphi 0, %s158
      %s160 = sphi 0, %s158
      %s161 = sphi 0, %s160
      %s175 = sphi 0, %s161
      %s183 = sphi 0, %s185
      %s186 = sphi 0, %s183
      %s187 = sphi 0, %s186
      %s203 = sphi 0, %s187
      %s211 = sphi 0, %s213
      %s214 = sphi 0, %s211
      %s215 = sphi 0, %s214
      %s231 = sphi 0, %s215
      %s239 = sphi 0, %s241
      %s242 = sphi 0, %s239
      %s243 = sphi 0, %s242
      %s259 = sphi 0, %s243
    $region4: #{tpu_custom_call.1} parent=1 // loop_header_branch
      %29 = sbr.rel (%p27) target = $region8
    $region5: #{tpu_custom_call.1} parent=1 // loop_body
      %s31 = ssub.s32 %s26, 1
      %s32 = ssub.s32 %s26, 2
      %s39 = sadd.s32 1, %s34
      %p40 = scmp.ge.s32.totalorder %s39, 1
      %s41 = scalar_select %p40, 0, %s39
      %s42 = sadd.s32 1, %s33
      %s43 = scalar_select %p40, %s42, %s33
      %p44 = scmp.ge.s32.totalorder %s43, 2
      %s45 = scalar_select %p44, 0, %s43
      %s46 = ssub.s32 %s33, %s45
      %s47 = ssub.s32 %s34, %s41
      %s48 = sor.u32 %s46, %s47
      %p49 = scmp.eq.s32.totalorder %s48, 0
      %s51 = sadd.s32 %s50, 1
      %s52 = scalar_select %p49, %s50, %s51
      %p55 = pneg %p49
      %p56 = scmp.eq.s32.totalorder %s26, 1
      %p57 = por %p55, %p56
      %p58 = scmp.ne.s32.totalorder %s50, %s53
      %p59 = scmp.eq.s32.totalorder %s26, 0
      %p60 = por %p58, %p59
      %p61 = scmp.ne.s32.totalorder %s50, %s53
      %p62 = scmp.eq.s32.totalorder %s31, 1
      %p63 = por %p61, %p62
      %p64 = scmp.ne.s32.totalorder %s53, %s54
      %p65 = scmp.eq.s32.totalorder %s31, 0
      %p66 = por %p64, %p65
      %p67 = scmp.ne.s32.totalorder %s53, %s54
      %p68 = scmp.eq.s32.totalorder %s32, 1
      %p69 = por %p67, %p68
      %p71 = scmp.ne.s32.totalorder %s54, %s70
      %p72 = scmp.eq.s32.totalorder %s32, 0
      %p73 = por %p71, %p72
      %s75 = sadd.s32 %s74, 1
      %p78 = scmp.eq.s32.totalorder %s26, 1
      %p79 = scmp.ne.s32.totalorder %s74, %s76
      %p80 = scmp.eq.s32.totalorder %s26, 0
      %p81 = por %p79, %p80
      %p82 = scmp.ne.s32.totalorder %s74, %s76
      %p83 = scmp.eq.s32.totalorder %s31, 1
      %p84 = por %p82, %p83
      %p85 = scmp.ne.s32.totalorder %s76, %s77
      %p86 = scmp.eq.s32.totalorder %s31, 0
      %p87 = por %p85, %p86
      %p88 = scmp.ne.s32.totalorder %s76, %s77
      %p89 = scmp.eq.s32.totalorder %s32, 1
      %p90 = por %p88, %p89
      %p92 = scmp.ne.s32.totalorder %s77, %s91
      %p93 = scmp.eq.s32.totalorder %s32, 0
      %p94 = por %p92, %p93
      %s96 = sadd.s32 %s95, 1
      %p99 = scmp.eq.s32.totalorder %s26, 1
      %p100 = scmp.ne.s32.totalorder %s95, %s97
      %p101 = scmp.eq.s32.totalorder %s26, 0
      %p102 = por %p100, %p101
      %p103 = scmp.ne.s32.totalorder %s95, %s97
      %p104 = scmp.eq.s32.totalorder %s31, 1
      %p105 = por %p103, %p104
      %p106 = scmp.ne.s32.totalorder %s97, %s98
      %p107 = scmp.eq.s32.totalorder %s31, 0
      %p108 = por %p106, %p107
      %p109 = scmp.ne.s32.totalorder %s97, %s98
      %p110 = scmp.eq.s32.totalorder %s32, 1
      %p111 = por %p109, %p110
      %p113 = scmp.ne.s32.totalorder %s98, %s112
      %p114 = scmp.eq.s32.totalorder %s32, 0
      %p115 = por %p113, %p114
      %s117 = sadd.s32 %s116, 1
      %p120 = scmp.eq.s32.totalorder %s26, 1
      %p121 = scmp.ne.s32.totalorder %s116, %s118
      %p122 = scmp.eq.s32.totalorder %s26, 0
      %p123 = por %p121, %p122
      %p124 = scmp.ne.s32.totalorder %s116, %s118
      %p125 = scmp.eq.s32.totalorder %s31, 1
      %p126 = por %p124, %p125
      %p127 = scmp.ne.s32.totalorder %s118, %s119
      %p128 = scmp.eq.s32.totalorder %s31, 0
      %p129 = por %p127, %p128
      %p130 = scmp.ne.s32.totalorder %s118, %s119
      %p131 = scmp.eq.s32.totalorder %s32, 1
      %p132 = por %p130, %p131
      %p134 = scmp.ne.s32.totalorder %s119, %s133
      %p135 = scmp.eq.s32.totalorder %s32, 0
      %p136 = por %p134, %p135
      %s138 = sadd.s32 %s137, 1
      %p141 = scmp.eq.s32.totalorder %s26, 1
      %p142 = scmp.ne.s32.totalorder %s137, %s139
      %p143 = scmp.eq.s32.totalorder %s26, 0
      %p144 = por %p142, %p143
      %p145 = scmp.ne.s32.totalorder %s137, %s139
      %p146 = scmp.eq.s32.totalorder %s31, 1
      %p147 = por %p145, %p146
      %p148 = scmp.ne.s32.totalorder %s139, %s140
      %p149 = scmp.eq.s32.totalorder %s31, 0
      %p150 = por %p148, %p149
      %p151 = scmp.ne.s32.totalorder %s139, %s140
      %p152 = scmp.eq.s32.totalorder %s32, 1
      %p153 = por %p151, %p152
      %p155 = scmp.ne.s32.totalorder %s140, %s154
      %p156 = scmp.eq.s32.totalorder %s32, 0
      %p157 = por %p155, %p156
      %s159 = sadd.s32 %s158, 1
      %p162 = scmp.eq.s32.totalorder %s26, 1
      %p163 = scmp.ne.s32.totalorder %s158, %s160
      %p164 = scmp.eq.s32.totalorder %s26, 0
      %p165 = por %p163, %p164
      %p166 = scmp.ne.s32.totalorder %s158, %s160
      %p167 = scmp.eq.s32.totalorder %s31, 1
      %p168 = por %p166, %p167
      %p169 = scmp.ne.s32.totalorder %s160, %s161
      %p170 = scmp.eq.s32.totalorder %s31, 0
      %p171 = por %p169, %p170
      %p172 = scmp.ne.s32.totalorder %s160, %s161
      %p173 = scmp.eq.s32.totalorder %s32, 1
      %p174 = por %p172, %p173
      %p176 = scmp.ne.s32.totalorder %s161, %s175
      %p177 = scmp.eq.s32.totalorder %s32, 0
      %p178 = por %p176, %p177
      %s179 = ssub.s32 %s33, %s45
      %s180 = ssub.s32 %s34, %s41
      %s181 = sor.u32 %s179, %s180
      %p182 = scmp.eq.s32.totalorder %s181, 0
      %s184 = sadd.s32 %s183, 1
      %s185 = scalar_select %p182, %s183, %s184
      %p188 = pneg %p182
      %p189 = scmp.eq.s32.totalorder %s26, 1
      %p190 = por %p188, %p189
      %p191 = scmp.ne.s32.totalorder %s183, %s186
      %p192 = scmp.eq.s32.totalorder %s26, 0
      %p193 = por %p191, %p192
      %p194 = scmp.ne.s32.totalorder %s183, %s186
      %p195 = scmp.eq.s32.totalorder %s31, 1
      %p196 = por %p194, %p195
      %p197 = scmp.ne.s32.totalorder %s186, %s187
      %p198 = scmp.eq.s32.totalorder %s31, 0
      %p199 = por %p197, %p198
      %p200 = scmp.ne.s32.totalorder %s186, %s187
      %p201 = scmp.eq.s32.totalorder %s32, 1
      %p202 = por %p200, %p201
      %p204 = scmp.ne.s32.totalorder %s187, %s203
      %p205 = scmp.eq.s32.totalorder %s32, 0
      %p206 = por %p204, %p205
      %s207 = ssub.s32 %s33, %s45
      %s208 = ssub.s32 %s34, %s41
      %s209 = sor.u32 %s207, %s208
      %p210 = scmp.eq.s32.totalorder %s209, 0
      %s212 = sadd.s32 %s211, 1
      %s213 = scalar_select %p210, %s211, %s212
      %p216 = pneg %p210
      %p217 = scmp.eq.s32.totalorder %s26, 1
      %p218 = por %p216, %p217
      %p219 = scmp.ne.s32.totalorder %s211, %s214
      %p220 = scmp.eq.s32.totalorder %s26, 0
      %p221 = por %p219, %p220
      %p222 = scmp.ne.s32.totalorder %s211, %s214
      %p223 = scmp.eq.s32.totalorder %s31, 1
      %p224 = por %p222, %p223
      %p225 = scmp.ne.s32.totalorder %s214, %s215
      %p226 = scmp.eq.s32.totalorder %s31, 0
      %p227 = por %p225, %p226
      %p228 = scmp.ne.s32.totalorder %s214, %s215
      %p229 = scmp.eq.s32.totalorder %s32, 1
      %p230 = por %p228, %p229
      %p232 = scmp.ne.s32.totalorder %s215, %s231
      %p233 = scmp.eq.s32.totalorder %s32, 0
      %p234 = por %p232, %p233
      %s235 = ssub.s32 %s33, %s45
      %s236 = ssub.s32 %s34, %s41
      %s237 = sor.u32 %s235, %s236
      %p238 = scmp.eq.s32.totalorder %s237, 0
      %s240 = sadd.s32 %s239, 1
      %s241 = scalar_select %p238, %s239, %s240
      %p244 = pneg %p238
      %p245 = scmp.eq.s32.totalorder %s26, 1
      %p246 = por %p244, %p245
      %p247 = scmp.ne.s32.totalorder %s239, %s242
      %p248 = scmp.eq.s32.totalorder %s26, 0
      %p249 = por %p247, %p248
      %p250 = scmp.ne.s32.totalorder %s239, %s242
      %p251 = scmp.eq.s32.totalorder %s31, 1
      %p252 = por %p250, %p251
      %p253 = scmp.ne.s32.totalorder %s242, %s243
      %p254 = scmp.eq.s32.totalorder %s31, 0
      %p255 = por %p253, %p254
      %p256 = scmp.ne.s32.totalorder %s242, %s243
      %p257 = scmp.eq.s32.totalorder %s32, 1
      %p258 = por %p256, %p257
      %p260 = scmp.ne.s32.totalorder %s243, %s259
      %p261 = scmp.eq.s32.totalorder %s32, 0
      %p262 = por %p260, %p261
      %p263 = scmp.le.s32.totalorder 1, %s26
      %p264 = scmp.lt.s32.totalorder %s26, 3
      %p265 = pnand %p263, %p264
      %p266 = pneg %p265
      // Predicated region
      $region9: #{tpu_custom_call.1} parent=5 // pred_check
        _
      $region10: #{tpu_custom_call.1} parent=5 // pred_check_branch
        %268 = sbr.rel (%p265) target = $region12
      $region11: #{tpu_custom_call.1} parent=5 // pred_region
        %s269 = ssub.s32 %s26, 1
        // Predicated region
        $region13: #{tpu_custom_call.1} parent=11 // pred_check
          %p270 = pneg %p87
        $region14: #{tpu_custom_call.1} parent=11 // pred_check_branch
          %272 = sbr.rel (%p270) target = $region16
        $region15: #{tpu_custom_call.1} parent=11 // pred_region
          %s274 = ssub.s32 512, 512
          %275 = vsyncadd [#allocation6], %s274
          %s276 = sshll.u32 [#allocation5], 4
          %s277 = int_to_ptr.vmem [resolvable:$true] %s276
          %282 = dma.hbm_to_vmem [thread:$0]  %s1, 512, %s277, [#allocation6], 128, 128, 8
        $region16: #{tpu_custom_call.1} parent=11 // pred_fallthru
          _
        // Predicated region
        $region17: #{tpu_custom_call.1} parent=11 // pred_check
          %p283 = pneg %p108
        $region18: #{tpu_custom_call.1} parent=11 // pred_check_branch
          %285 = sbr.rel (%p283) target = $region20
        $region19: #{tpu_custom_call.1} parent=11 // pred_region
          %s287 = ssub.s32 512, 512
          %288 = vsyncadd [#allocation6], %s287
          %s289 = sshll.u32 [#allocation7], 4
          %s290 = int_to_ptr.vmem [resolvable:$true] %s289
          %295 = dma.hbm_to_vmem [thread:$0]  %s2, 512, %s290, [#allocation6], 128, 128, 8
        $region20: #{tpu_custom_call.1} parent=11 // pred_fallthru
          _
        // Predicated region
        $region21: #{tpu_custom_call.1} parent=11 // pred_check
          %p296 = pneg %p129
        $region22: #{tpu_custom_call.1} parent=11 // pred_check_branch
          %298 = sbr.rel (%p296) target = $region24
        $region23: #{tpu_custom_call.1} parent=11 // pred_region
          %s300 = ssub.s32 512, 512
          %301 = vsyncadd [#allocation9], %s300
          %s302 = sshll.u32 [#allocation8], 4
          %s303 = int_to_ptr.vmem [resolvable:$true] %s302
          %308 = dma.hbm_to_vmem [thread:$0]  %s3, 512, %s303, [#allocation9], 128, 128, 8
        $region24: #{tpu_custom_call.1} parent=11 // pred_fallthru
          _
        // Predicated region
        $region25: #{tpu_custom_call.1} parent=11 // pred_check
          %p309 = pneg %p150
        $region26: #{tpu_custom_call.1} parent=11 // pred_check_branch
          %311 = sbr.rel (%p309) target = $region28
        $region27: #{tpu_custom_call.1} parent=11 // pred_region
          _
        $region28: #{tpu_custom_call.1} parent=11 // pred_fallthru
          _
        // Predicated region
        $region29: #{tpu_custom_call.1} parent=11 // pred_check
          %p312 = pneg %p171
        $region30: #{tpu_custom_call.1} parent=11 // pred_check_branch
          %314 = sbr.rel (%p312) target = $region32
        $region31: #{tpu_custom_call.1} parent=11 // pred_region
          _
        $region32: #{tpu_custom_call.1} parent=11 // pred_fallthru
          _
      $region12: #{tpu_custom_call.1} parent=5 // pred_fallthru
        _
      %p315 = scmp.lt.s32.totalorder %s26, 2
      // Predicated region
      $region33: #{tpu_custom_call.1} parent=5 // pred_check
        %p316 = pneg %p315
      $region34: #{tpu_custom_call.1} parent=5 // pred_check_branch
        %318 = sbr.rel (%p316) target = $region36
      $region35: #{tpu_custom_call.1} parent=5 // pred_region
        // Predicated region
        $region37: #{tpu_custom_call.1} parent=35 // pred_check
          %p319 = pneg %p60
        $region38: #{tpu_custom_call.1} parent=35 // pred_check_branch
          %321 = sbr.rel (%p319) target = $region40
        $region39: #{tpu_custom_call.1} parent=35 // pred_region
          %s322 = sand.u32 %s50, 1
          %s323 = scalar_lea.sflag [#allocation3], %s322
          %s324 = sand.u32 %s50, 1
          %s325 = smul.addr %s324, 8
          %s326 = scalar_lea.vmem [#allocation2], %s325
          %s328 = ssub.s32 128, 128
          %329 = vsyncadd %s323, %s328
          %s330 = sadd.s32 %s34, %s33
          %s331 = smul.addr %s330, 128
          %s332 = scalar_lea.hbm %s0, %s331
          %s334 = sshll.u32 %s326, 4
          %s335 = int_to_ptr.vmem [resolvable:$true] %s334
          %337 = dma.hbm_to_vmem [thread:$0]  %s332, 128, %s335, %s323
        $region40: #{tpu_custom_call.1} parent=35 // pred_fallthru
          _
      $region36: #{tpu_custom_call.1} parent=5 // pred_fallthru
        _
      %p338 = scmp.le.s32.totalorder 1, %s26
      %p339 = scmp.lt.s32.totalorder %s26, 3
      %p340 = pnand %p338, %p339
      %p341 = pneg %p340
      // Predicated region
      $region41: #{tpu_custom_call.1} parent=5 // pred_check
        _
      $region42: #{tpu_custom_call.1} parent=5 // pred_check_branch
        %343 = sbr.rel (%p340) target = $region44
      $region43: #{tpu_custom_call.1} parent=5 // pred_region
        %s344 = ssub.s32 %s26, 1
        %s345 = sand.u32 %s53, 1
        %s346 = scalar_lea.sflag [#allocation3], %s345
        %s347 = sand.u32 %s53, 1
        %s348 = smul.addr %s347, 8
        %s349 = scalar_lea.vmem [#allocation2], %s348
        // Predicated region
        $region45: #{tpu_custom_call.1} parent=43 // pred_check
          %p350 = pneg %p66
        $region46: #{tpu_custom_call.1} parent=43 // pred_check_branch
          %352 = sbr.rel (%p350) target = $region48
        $region47: #{tpu_custom_call.1} parent=43 // pred_region
          %353 = dma.done %s346, 128
        $region48: #{tpu_custom_call.1} parent=43 // pred_fallthru
          _
        // Predicated region
        $region49: #{tpu_custom_call.1} parent=43 // pred_check
          %p354 = pneg %p87
        $region50: #{tpu_custom_call.1} parent=43 // pred_check_branch
          %356 = sbr.rel (%p354) target = $region52
        $region51: #{tpu_custom_call.1} parent=43 // pred_region
          %357 = dma.done [#allocation6], 512
        $region52: #{tpu_custom_call.1} parent=43 // pred_fallthru
          _
        // Predicated region
        $region53: #{tpu_custom_call.1} parent=43 // pred_check
          %p358 = pneg %p108
        $region54: #{tpu_custom_call.1} parent=43 // pred_check_branch
          %360 = sbr.rel (%p358) target = $region56
        $region55: #{tpu_custom_call.1} parent=43 // pred_region
          %361 = dma.done [#allocation6], 512
        $region56: #{tpu_custom_call.1} parent=43 // pred_fallthru
          _
        // Predicated region
        $region57: #{tpu_custom_call.1} parent=43 // pred_check
          %p362 = pneg %p129
        $region58: #{tpu_custom_call.1} parent=43 // pred_check_branch
          %364 = sbr.rel (%p362) target = $region60
        $region59: #{tpu_custom_call.1} parent=43 // pred_region
          %365 = dma.done [#allocation9], 512
        $region60: #{tpu_custom_call.1} parent=43 // pred_fallthru
          _
        %s366 = sand.u32 %s53, 1
        %s367 = scalar_lea.sflag [#allocation3], %s366
        %s368 = sand.u32 %s53, 1
        %s369 = smul.addr %s368, 8
        %s370 = scalar_lea.vmem [#allocation2], %s369
        %p371 = pneg %p66
        %p372 = pneg %p63
        %p373 = pneg %p87
        %p374 = pneg %p84
        %p375 = pneg %p108
        %p376 = pneg %p105
        %p377 = pneg %p129
        %p378 = pneg %p126
        %p379 = pneg %p150
        %p380 = pneg %p147
        %p381 = pneg %p171
        %p382 = pneg %p168
        %p383 = pneg %p199
        %p384 = pneg %p196
        %s385 = sand.u32 %s186, 1
        %s386 = scalar_lea.sflag [#allocation4], %s385
        %s387 = sand.u32 %s186, 1
        %s388 = smul.addr %s387, 8
        %s389 = scalar_lea.vmem [#allocation10], %s388
        %p390 = pneg %p227
        %p391 = pneg %p224
        %s392 = sand.u32 %s31, 1
        %s393 = scalar_lea.sflag [#allocation12], %s392
        %s394 = sand.u32 %s214, 1
        %s395 = smul.addr %s394, 8
        %s396 = scalar_lea.vmem [#allocation11], %s395
        %p397 = pneg %p255
        %p398 = pneg %p252
        %s399 = sand.u32 %s31, 1
        %s400 = scalar_lea.sflag [#allocation12], %s399
        %s401 = sand.u32 %s242, 1
        %s402 = smul.addr %s401, 8
        %s403 = scalar_lea.vmem [#allocation13], %s402
        %v404 = vld [vmem:[%s349] sm:$0xff]
        %v405 = vld [vmem:[%s4] sm:$0x1]
        %v406 = vld [vmem:[%s5] sm:$0x1]
        %vm407 = vcmask 261120
        %v408 = vsel %vm407, %v404, 0.0
        %409 = vadd.xlane.f32.xlu0 %v408
        %v410 = vpop.xlane.xlu0 %409
        %v411 = vrcp.pop 32.0
        %v412 = vmul.f32 %v410, %v411
        %v413 = vsub.f32 %v404, %v412
        %v414 = vmul.f32 %v413, %v413
        %v415 = vsel %vm407, %v414, 0.0
        %416 = vadd.xlane.f32.xlu0 %v415
        %v417 = vpop.xlane.xlu0 %416
        %v418 = vrcp.pop 31.0
        %v419 = vmul.f32 %v417, %v418
        %v421 = vlaneseq
        %v422 = vshrl.u32 %v421, 7
        %v423 = vsub.s32 0, %v422
        %v424 = vrot.slane %v405, %v423
        %v426 = vmul.f32 %v424, %v413
        %v427 = vrsqrt.pop %v419
        %v428 = vmul.f32 %v419, %v427
        %vm429 = vcmp.eq.f32.partialorder %v419, inf
        %v430 = vsel %vm429, %v419, %v428
        %vm431 = vcmp.eq.f32.partialorder %v419, 0.0
        %v432 = vand.u32 %v419, 2147483648
        %v433 = vsel %vm431, %v432, %v430
        %v434 = vadd.f32 %v433, 1e-06
        %v435 = vrcp.pop %v434
        %v436 = vmul.f32 %v426, %v435
        %v438 = vlaneseq
        %v439 = vshrl.u32 %v438, 7
        %v440 = vsub.s32 0, %v439
        %v441 = vrot.slane %v406, %v440
        %v443 = vadd.f32 %v436, %v441
        %v444 = vld [vmem:[#allocation5] sm:$0xff]
        %v445 = vld [vmem:[#allocation5 + $0x8] sm:$0xff]
        %v446 = vld [vmem:[#allocation5 + $0x10] sm:$0xff]
        %v447 = vld [vmem:[#allocation5 + $0x18] sm:$0xff]
        %v449 = vsel %vm407, %v443, 0
        %451 = vmatprep.subr.mxu0 0.0
        %452 = vmatpush1.msra.mxu0 %v444
        %453 = vmatprep.subr.mxu0 0.0
        %454 = vmatpush1.msra.mxu0 %v445
        %455 = vmatprep.subr.mxu0 0.0
        %456 = vmatpush1.msra.mxu0 %v446
        %457 = vmatprep.subr.mxu0 0.0
        %458 = vmatpush1.msra.mxu0 %v447
        %459 = vmatprep.subr.mxu0 0.0
        %460 = vmatpush1.msra.mxu0 0.0
        %461 = vmatprep.subr.mxu0 0.0
        %462 = vmatpush1.msra.mxu0 0.0
        %463 = vmatprep.subr.mxu0 0.0
        %464 = vmatpush1.msra.mxu0 0.0
        %465 = vmatprep.subr.mxu0 0.0
        %466 = vmatpush1.msra.mxu0 0.0
        %467 = vmatprep.subr.mxu0 0.0
        %468 = vmatpush1.msra.mxu0 0.0
        %469 = vmatprep.subr.mxu0 0.0
        %470 = vmatpush1.msra.mxu0 0.0
        %471 = vmatprep.subr.mxu0 0.0
        %472 = vmatpush1.msra.mxu0 0.0
        %473 = vmatprep.subr.mxu0 0.0
        %474 = vmatpush1.msra.mxu0 0.0
        %475 = vmatprep.subr.mxu0 0.0
        %476 = vmatpush1.msra.mxu0 0.0
        %477 = vmatprep.subr.mxu0 0.0
        %478 = vmatpush1.msra.mxu0 0.0
        %479 = vmatprep.subr.mxu0 0.0
        %480 = vmatpush1.msra.mxu0 0.0
        %481 = vmatprep.subr.mxu0 0.0
        %482 = vmatpush1.msra.mxu0 0.0
        %483 = vmatprep.subr.mxu0 0.0
        %484 = vmatpush1.msra.mxu0 0.0
        %485 = vmatprep.subr.mxu0 0.0
        %486 = vmatpush1.msra.mxu0 0.0
        %487 = vmatprep.subr.mxu0 0.0
        %488 = vmatpush1.msra.mxu0 0.0
        %489 = vmatprep.subr.mxu0 0.0
        %490 = vmatpush1.msra.mxu0 0.0
        %491 = vmatprep.subr.mxu0 0.0
        %492 = vmatpush1.msra.mxu0 0.0
        %493 = vmatprep.subr.mxu0 0.0
        %494 = vmatpush1.msra.mxu0 0.0
        %495 = vmatprep.subr.mxu0 0.0
        %496 = vmatpush1.msra.mxu0 0.0
        %497 = vmatprep.subr.mxu0 0.0
        %498 = vmatpush1.msra.mxu0 0.0
        %499 = vmatprep.subr.mxu0 0.0
        %500 = vmatpush1.msra.mxu0 0.0
        %501 = vmatprep.subr.mxu0 0.0
        %502 = vmatpush1.msra.mxu0 0.0
        %503 = vmatprep.subr.mxu0 0.0
        %504 = vmatpush1.msra.mxu0 0.0
        %505 = vmatprep.subr.mxu0 0.0
        %506 = vmatpush1.msra.mxu0 0.0
        %507 = vmatprep.subr.mxu0 0.0
        %508 = vmatpush1.msra.mxu0 0.0
        %509 = vmatprep.subr.mxu0 0.0
        %510 = vmatpush1.msra.mxu0 0.0
        %511 = vmatprep.subr.mxu0 0.0
        %512 = vmatpush1.msra.mxu0 0.0
        %513 = vmatprep.subr.mxu0 0.0
        %514 = vmatpush1.msra.mxu0 0.0
        %515 = vmatprep.mubr.f32.mxu0 0.0
        %516 = vmatmul.mubr.f32.gmra.mrb[0].mxu0 %v449
        %v517 = vpop.f32.mrb[0].mxu0
        %v518 = vadd.f32 0.0, %v517
        %v519 = vpop.f32.mrb[0].mxu0
        %520 = vdwg.mxu0
        %521 = vst.msk [vmem:[%s389] sm:$0xff] %vm407, %v518
        %v522 = vld [vmem:[#allocation7] sm:$0xff]
        %v523 = vld [vmem:[#allocation7 + $0x8] sm:$0xff]
        %v524 = vld [vmem:[#allocation7 + $0x10] sm:$0xff]
        %v525 = vld [vmem:[#allocation7 + $0x18] sm:$0xff]
        %526 = vmatprep.subr.mxu0 0.0
        %527 = vmatpush1.msra.mxu0 %v522
        %528 = vmatprep.subr.mxu0 0.0
        %529 = vmatpush1.msra.mxu0 %v523
        %530 = vmatprep.subr.mxu0 0.0
        %531 = vmatpush1.msra.mxu0 %v524
        %532 = vmatprep.subr.mxu0 0.0
        %533 = vmatpush1.msra.mxu0 %v525
        %534 = vmatprep.subr.mxu0 0.0
        %535 = vmatpush1.msra.mxu0 0.0
        %536 = vmatprep.subr.mxu0 0.0
        %537 = vmatpush1.msra.mxu0 0.0
        %538 = vmatprep.subr.mxu0 0.0
        %539 = vmatpush1.msra.mxu0 0.0
        %540 = vmatprep.subr.mxu0 0.0
        %541 = vmatpush1.msra.mxu0 0.0
        %542 = vmatprep.subr.mxu0 0.0
        %543 = vmatpush1.msra.mxu0 0.0
        %544 = vmatprep.subr.mxu0 0.0
        %545 = vmatpush1.msra.mxu0 0.0
        %546 = vmatprep.subr.mxu0 0.0
        %547 = vmatpush1.msra.mxu0 0.0
        %548 = vmatprep.subr.mxu0 0.0
        %549 = vmatpush1.msra.mxu0 0.0
        %550 = vmatprep.subr.mxu0 0.0
        %551 = vmatpush1.msra.mxu0 0.0
        %552 = vmatprep.subr.mxu0 0.0
        %553 = vmatpush1.msra.mxu0 0.0
        %554 = vmatprep.subr.mxu0 0.0
        %555 = vmatpush1.msra.mxu0 0.0
        %556 = vmatprep.subr.mxu0 0.0
        %557 = vmatpush1.msra.mxu0 0.0
        %558 = vmatprep.subr.mxu0 0.0
        %559 = vmatpush1.msra.mxu0 0.0
        %560 = vmatprep.subr.mxu0 0.0
        %561 = vmatpush1.msra.mxu0 0.0
        %562 = vmatprep.subr.mxu0 0.0
        %563 = vmatpush1.msra.mxu0 0.0
        %564 = vmatprep.subr.mxu0 0.0
        %565 = vmatpush1.msra.mxu0 0.0
        %566 = vmatprep.subr.mxu0 0.0
        %567 = vmatpush1.msra.mxu0 0.0
        %568 = vmatprep.subr.mxu0 0.0
        %569 = vmatpush1.msra.mxu0 0.0
        %570 = vmatprep.subr.mxu0 0.0
        %571 = vmatpush1.msra.mxu0 0.0
        %572 = vmatprep.subr.mxu0 0.0
        %573 = vmatpush1.msra.mxu0 0.0
        %574 = vmatprep.subr.mxu0 0.0
        %575 = vmatpush1.msra.mxu0 0.0
        %576 = vmatprep.subr.mxu0 0.0
        %577 = vmatpush1.msra.mxu0 0.0
        %578 = vmatprep.subr.mxu0 0.0
        %579 = vmatpush1.msra.mxu0 0.0
        %580 = vmatprep.subr.mxu0 0.0
        %581 = vmatpush1.msra.mxu0 0.0
        %582 = vmatprep.subr.mxu0 0.0
        %583 = vmatpush1.msra.mxu0 0.0
        %584 = vmatprep.subr.mxu0 0.0
        %585 = vmatpush1.msra.mxu0 0.0
        %586 = vmatprep.subr.mxu0 0.0
        %587 = vmatpush1.msra.mxu0 0.0
        %588 = vmatprep.subr.mxu0 0.0
        %589 = vmatpush1.msra.mxu0 0.0
        %590 = vmatprep.mubr.f32.mxu0 0.0
        %591 = vmatmul.mubr.f32.gmra.mrb[0].mxu0 %v449
        %v592 = vpop.f32.mrb[0].mxu0
        %v593 = vadd.f32 0.0, %v592
        %v594 = vpop.f32.mrb[0].mxu0
        %595 = vdwg.mxu0
        %596 = vst.msk [vmem:[%s396] sm:$0xff] %vm407, %v593
        %v597 = vld [vmem:[#allocation8] sm:$0xff]
        %v598 = vld [vmem:[#allocation8 + $0x8] sm:$0xff]
        %v599 = vld [vmem:[#allocation8 + $0x10] sm:$0xff]
        %v600 = vld [vmem:[#allocation8 + $0x18] sm:$0xff]
        %601 = vmatprep.subr.mxu0 0.0
        %602 = vmatpush1.msra.mxu0 %v597
        %603 = vmatprep.subr.mxu0 0.0
        %604 = vmatpush1.msra.mxu0 %v598
        %605 = vmatprep.subr.mxu0 0.0
        %606 = vmatpush1.msra.mxu0 %v599
        %607 = vmatprep.subr.mxu0 0.0
        %608 = vmatpush1.msra.mxu0 %v600
        %609 = vmatprep.subr.mxu0 0.0
        %610 = vmatpush1.msra.mxu0 0.0
        %611 = vmatprep.subr.mxu0 0.0
        %612 = vmatpush1.msra.mxu0 0.0
        %613 = vmatprep.subr.mxu0 0.0
        %614 = vmatpush1.msra.mxu0 0.0
        %615 = vmatprep.subr.mxu0 0.0
        %616 = vmatpush1.msra.mxu0 0.0
        %617 = vmatprep.subr.mxu0 0.0
        %618 = vmatpush1.msra.mxu0 0.0
        %619 = vmatprep.subr.mxu0 0.0
        %620 = vmatpush1.msra.mxu0 0.0
        %621 = vmatprep.subr.mxu0 0.0
        %622 = vmatpush1.msra.mxu0 0.0
        %623 = vmatprep.subr.mxu0 0.0
        %624 = vmatpush1.msra.mxu0 0.0
        %625 = vmatprep.subr.mxu0 0.0
        %626 = vmatpush1.msra.mxu0 0.0
        %627 = vmatprep.subr.mxu0 0.0
        %628 = vmatpush1.msra.mxu0 0.0
        %629 = vmatprep.subr.mxu0 0.0
        %630 = vmatpush1.msra.mxu0 0.0
        %631 = vmatprep.subr.mxu0 0.0
        %632 = vmatpush1.msra.mxu0 0.0
        %633 = vmatprep.subr.mxu0 0.0
        %634 = vmatpush1.msra.mxu0 0.0
        %635 = vmatprep.subr.mxu0 0.0
        %636 = vmatpush1.msra.mxu0 0.0
        %637 = vmatprep.subr.mxu0 0.0
        %638 = vmatpush1.msra.mxu0 0.0
        %639 = vmatprep.subr.mxu0 0.0
        %640 = vmatpush1.msra.mxu0 0.0
        %641 = vmatprep.subr.mxu0 0.0
        %642 = vmatpush1.msra.mxu0 0.0
        %643 = vmatprep.subr.mxu0 0.0
        %644 = vmatpush1.msra.mxu0 0.0
        %645 = vmatprep.subr.mxu0 0.0
        %646 = vmatpush1.msra.mxu0 0.0
        %647 = vmatprep.subr.mxu0 0.0
        %648 = vmatpush1.msra.mxu0 0.0
        %649 = vmatprep.subr.mxu0 0.0
        %650 = vmatpush1.msra.mxu0 0.0
        %651 = vmatprep.subr.mxu0 0.0
        %652 = vmatpush1.msra.mxu0 0.0
        %653 = vmatprep.subr.mxu0 0.0
        %654 = vmatpush1.msra.mxu0 0.0
        %655 = vmatprep.subr.mxu0 0.0
        %656 = vmatpush1.msra.mxu0 0.0
        %657 = vmatprep.subr.mxu0 0.0
        %658 = vmatpush1.msra.mxu0 0.0
        %659 = vmatprep.subr.mxu0 0.0
        %660 = vmatpush1.msra.mxu0 0.0
        %661 = vmatprep.subr.mxu0 0.0
        %662 = vmatpush1.msra.mxu0 0.0
        %663 = vmatprep.subr.mxu0 0.0
        %664 = vmatpush1.msra.mxu0 0.0
        %665 = vmatprep.mubr.f32.mxu0 0.0
        %666 = vmatmul.mubr.f32.gmra.mrb[0].mxu0 %v449
        %v667 = vpop.f32.mrb[0].mxu0
        %v668 = vadd.f32 0.0, %v667
        %v669 = vpop.f32.mrb[0].mxu0
        %670 = vdwg.mxu0
        %671 = vst.msk [vmem:[%s403] sm:$0xff] %vm407, %v668
        %s672 = sand.u32 %s186, 1
        %s673 = scalar_lea.sflag [#allocation4], %s672
        %s674 = sand.u32 %s186, 1
        %s675 = smul.addr %s674, 8
        %s676 = scalar_lea.vmem [#allocation10], %s675
        %s677 = sand.u32 %s31, 1
        %s678 = scalar_lea.sflag [#allocation12], %s677
        %s679 = sand.u32 %s214, 1
        %s680 = smul.addr %s679, 8
        %s681 = scalar_lea.vmem [#allocation11], %s680
        %s682 = sand.u32 %s31, 1
        %s683 = scalar_lea.sflag [#allocation12], %s682
        %s684 = sand.u32 %s242, 1
        %s685 = smul.addr %s684, 8
        %s686 = scalar_lea.vmem [#allocation13], %s685
        // Predicated region
        $region61: #{tpu_custom_call.1} parent=43 // pred_check
          %p687 = pneg %p196
        $region62: #{tpu_custom_call.1} parent=43 // pred_check_branch
          %689 = sbr.rel (%p687) target = $region64
        $region63: #{tpu_custom_call.1} parent=43 // pred_region
          %s691 = ssub.s32 128, 128
          %692 = vsyncadd %s673, %s691
          %s693 = sadd.s32 %s36, %s35
          %s694 = smul.addr %s693, 128
          %s695 = scalar_lea.hbm %s6, %s694
          %s697 = sshll.u32 %s676, 4
          %s698 = int_to_ptr.vmem [resolvable:$true] %s697
          %700 = dma.vmem_to_hbm [thread:$0]  %s698, 128, %s695, %s673
        $region64: #{tpu_custom_call.1} parent=43 // pred_fallthru
          _
        // Predicated region
        $region65: #{tpu_custom_call.1} parent=43 // pred_check
          %p701 = pneg %p224
        $region66: #{tpu_custom_call.1} parent=43 // pred_check_branch
          %703 = sbr.rel (%p701) target = $region68
        $region67: #{tpu_custom_call.1} parent=43 // pred_region
          %s705 = ssub.s32 128, 128
          %706 = vsyncadd %s678, %s705
          %s707 = sadd.s32 %s36, %s35
          %s708 = smul.addr %s707, 128
          %s709 = scalar_lea.hbm %s7, %s708
          %s711 = sshll.u32 %s681, 4
          %s712 = int_to_ptr.vmem [resolvable:$true] %s711
          %714 = dma.vmem_to_hbm [thread:$0]  %s712, 128, %s709, %s678
        $region68: #{tpu_custom_call.1} parent=43 // pred_fallthru
          _
        // Predicated region
        $region69: #{tpu_custom_call.1} parent=43 // pred_check
          %p715 = pneg %p252
        $region70: #{tpu_custom_call.1} parent=43 // pred_check_branch
          %717 = sbr.rel (%p715) target = $region72
        $region71: #{tpu_custom_call.1} parent=43 // pred_region
          %s719 = ssub.s32 128, 128
          %720 = vsyncadd %s683, %s719
          %s721 = sadd.s32 %s36, %s35
          %s722 = smul.addr %s721, 128
          %s723 = scalar_lea.hbm %s8, %s722
          %s725 = sshll.u32 %s686, 4
          %s726 = int_to_ptr.vmem [resolvable:$true] %s725
          %728 = dma.vmem_to_hbm [thread:$0]  %s726, 128, %s723, %s683
        $region72: #{tpu_custom_call.1} parent=43 // pred_fallthru
          _
      $region44: #{tpu_custom_call.1} parent=5 // pred_fallthru
        _
      %p729 = scmp.le.s32.totalorder 2, %s26
      // Predicated region
      $region73: #{tpu_custom_call.1} parent=5 // pred_check
        %p730 = pneg %p729
      $region74: #{tpu_custom_call.1} parent=5 // pred_check_branch
        %732 = sbr.rel (%p730) target = $region76
      $region75: #{tpu_custom_call.1} parent=5 // pred_region
        %s733 = ssub.s32 %s26, 2
        // Predicated region
        $region77: #{tpu_custom_call.1} parent=75 // pred_check
          %p734 = pneg %p202
        $region78: #{tpu_custom_call.1} parent=75 // pred_check_branch
          %736 = sbr.rel (%p734) target = $region80
        $region79: #{tpu_custom_call.1} parent=75 // pred_region
          %s737 = sand.u32 %s187, 1
          %s738 = scalar_lea.sflag [#allocation4], %s737
          %s739 = sand.u32 %s187, 1
          %s740 = smul.addr %s739, 8
          %s741 = scalar_lea.vmem [#allocation10], %s740
          %742 = dma.done %s738, 128
        $region80: #{tpu_custom_call.1} parent=75 // pred_fallthru
          _
        // Predicated region
        $region81: #{tpu_custom_call.1} parent=75 // pred_check
          %p743 = pneg %p230
        $region82: #{tpu_custom_call.1} parent=75 // pred_check_branch
          %745 = sbr.rel (%p743) target = $region84
        $region83: #{tpu_custom_call.1} parent=75 // pred_region
          %s746 = sand.u32 %s32, 1
          %s747 = scalar_lea.sflag [#allocation12], %s746
          %s748 = sand.u32 %s215, 1
          %s749 = smul.addr %s748, 8
          %s750 = scalar_lea.vmem [#allocation11], %s749
          %751 = dma.done %s747, 128
        $region84: #{tpu_custom_call.1} parent=75 // pred_fallthru
          _
        // Predicated region
        $region85: #{tpu_custom_call.1} parent=75 // pred_check
          %p752 = pneg %p258
        $region86: #{tpu_custom_call.1} parent=75 // pred_check_branch
          %754 = sbr.rel (%p752) target = $region88
        $region87: #{tpu_custom_call.1} parent=75 // pred_region
          %s755 = sand.u32 %s32, 1
          %s756 = scalar_lea.sflag [#allocation12], %s755
          %s757 = sand.u32 %s243, 1
          %s758 = smul.addr %s757, 8
          %s759 = scalar_lea.vmem [#allocation13], %s758
          %760 = dma.done %s756, 128
        $region88: #{tpu_custom_call.1} parent=75 // pred_fallthru
          _
      $region76: #{tpu_custom_call.1} parent=5 // pred_fallthru
        _
    $region6: #{tpu_custom_call.1} parent=1 // loop_footer
      %s30 = sadd.s32 1, %s26
    $region7: #{tpu_custom_call.1} parent=1 // loop_footer_branch
      %25 = sbr.rel target = $region3
    $region8: #{tpu_custom_call.1} parent=1 // loop_exit
      _
    %761 = vsyncpa [#allocation3], 1
    %s762 = scalar_lea.sflag [#allocation3], 1
    %763 = vsyncpa %s762, 1
    %764 = vsyncpa [#allocation6], 1
    %765 = vsyncpa [#allocation9], 1
    %766 = vsyncpa [#allocation4], 1
    %s767 = scalar_lea.sflag [#allocation4], 1
    %768 = vsyncpa %s767, 1
    %769 = vsyncpa [#allocation12], 1
    %s770 = scalar_lea.sflag [#allocation12], 1
    %771 = vsyncpa %s770, 1

</llo_original>
